<compile_context>
chip_gen: v7x
topology: tpu7x:2x2x1
jax: 0.10.0
libtpu: 0.0.40
codegen_flags: <defaults>
</compile_context>

<pallas_src>
import functools

import jax
import jax.numpy as jnp
from jax.experimental import pallas as pl
from jax.experimental.pallas import tpu as pltpu


def _round_up(x, m):
    return (x + m - 1) // m * m


def _memory_bank_kernel(x_ref, wcat_ref, bias_ref, values_ref,
                        pure_ref, adapted_ref, adapted_ft_ref,
                        *, alpha, beta, c_pad, nb_pad):
    x = x_ref[...]                                              # (TB, H)

    # One fused MXU launch: [pure_pre_bias | affinity | ft_affinity]
    z = jnp.dot(x, wcat_ref[...], preferred_element_type=jnp.float32)

    pure = z[:, :c_pad] + bias_ref[...]                         # (TB, Cp)
    aff = z[:, c_pad:c_pad + nb_pad]                            # (TB, Nbp)
    ft_aff = z[:, c_pad + nb_pad:]                              # (TB, Nbp)

    # exp(-(beta - beta*a)) == exp(beta*(a - 1)); stack both paths along M so the
    # bank_values contraction is a single MXU launch.  exp rides the EUP slot.
    e = jnp.exp(beta * (jnp.concatenate([aff, ft_aff], axis=0) - 1.0))
    bank = jnp.dot(e, values_ref[...], preferred_element_type=jnp.float32)  # (2TB, Cp)

    tb = x.shape[0]
    pure_ref[...] = pure
    adapted_ref[...] = pure + alpha * bank[:tb]
    adapted_ft_ref[...] = pure + alpha * bank[tb:]


def automm_memory_bank_forward(x, bank_keys, adapter_weight, bank_values,
                               head_weight, head_bias, alpha=1.0, beta=1.0,
                               tile_b=512):
    """Glue (padding / concat / slicing) in plain JAX, hot path in Pallas.

    x:              (B, H) float32
    bank_keys:      (H, Nb) float32
    adapter_weight: (Nb, H) float32  (nn.Linear weight layout, == bank_keys.T at init)
    bank_values:    (Nb, C) float32  (one-hot labels)
    head_weight:    (C, H) float32   (nn.Linear weight layout)
    head_bias:      (C,)  float32
    """
    f32 = jnp.float32
    B, H = x.shape
    Nb = bank_keys.shape[1]
    C = head_weight.shape[0]

    # Lane-dense padding targets.
    Cp = _round_up(C, 128)
    Nbp = _round_up(Nb, 128)

    # Batch tiling (TB rows per grid step; weights stay resident, x/outputs stream).
    TB = min(int(tile_b), _round_up(B, 8))
    Bp = _round_up(B, TB)

    # Fused, zero-padded weight: [head_wt (H,Cp) | keys (H,Nbp) | adapter_wt (H,Nbp)].
    head_wt = jnp.zeros((H, Cp), f32).at[:, :C].set(head_weight.T.astype(f32))
    keys_p = jnp.zeros((H, Nbp), f32).at[:, :Nb].set(bank_keys.astype(f32))
    adapt_p = jnp.zeros((H, Nbp), f32).at[:, :Nb].set(adapter_weight.T.astype(f32))
    w_cat = jnp.concatenate([head_wt, keys_p, adapt_p], axis=1)       # (H, Cp+2*Nbp)

    bias_p = jnp.zeros((1, Cp), f32).at[0, :C].set(head_bias.astype(f32))
    # Zero value-rows/cols => padded bank entries contribute exactly 0.
    values_p = jnp.zeros((Nbp, Cp), f32).at[:Nb, :C].set(bank_values.astype(f32))

    x_p = x.astype(f32)
    if Bp != B:
        x_p = jnp.pad(x_p, ((0, Bp - B), (0, 0)))

    Wn = Cp + 2 * Nbp
    grid = (Bp // TB,)

    kernel = functools.partial(_memory_bank_kernel,
                               alpha=float(alpha), beta=float(beta),
                               c_pad=Cp, nb_pad=Nbp)

    out_shape = tuple(jax.ShapeDtypeStruct((Bp, Cp), f32) for _ in range(3))

    pure, adapted, adapted_ft = pl.pallas_call(
        kernel,
        out_shape=out_shape,
        grid=grid,
        in_specs=[
            pl.BlockSpec((TB, H), lambda i: (i, 0)),      # x: streamed over batch
            pl.BlockSpec((H, Wn), lambda i: (0, 0)),      # fused weights: resident
            pl.BlockSpec((1, Cp), lambda i: (0, 0)),      # bias: resident
            pl.BlockSpec((Nbp, Cp), lambda i: (0, 0)),    # bank values: resident
        ],
        out_specs=(
            pl.BlockSpec((TB, Cp), lambda i: (i, 0)),
            pl.BlockSpec((TB, Cp), lambda i: (i, 0)),
            pl.BlockSpec((TB, Cp), lambda i: (i, 0)),
        ),
        compiler_params=pltpu.CompilerParams(
            dimension_semantics=("parallel",)),           # 2-TC split on v7x
    )(x_p, w_cat, bias_p, values_p)

    return {
        "pure_logits": pure[:B, :C],
        "adapted_logits": adapted[:B, :C],
        "adapted_logits_with_finetuning": adapted_ft[:B, :C],
    }


def _reference_forward(x, bank_keys, adapter_weight, bank_values,
                       head_weight, head_bias, alpha=1.0, beta=1.0):
    pure = x @ head_weight.T + head_bias
    aff = x @ bank_keys
    bank = jnp.exp(-(beta - beta * aff)) @ bank_values
    adapted = pure + alpha * bank
    ft_aff = x @ adapter_weight.T
    ft_bank = jnp.exp(-(beta - beta * ft_aff)) @ bank_values
    adapted_ft = pure + alpha * ft_bank
    return pure, adapted, adapted_ft


if __name__ == "__main__":
    # Small, forward-consistent shapes: batch=8, hidden=32, bank entries=16, classes=4.
    B, H, Nb, C = 8, 32, 16, 4

    key = jax.random.PRNGKey(0)
    k_x, k_keys, k_labels, k_hw, k_hb = jax.random.split(key, 5)

    x = jax.random.normal(k_x, (B, H), dtype=jnp.float32)
    bank_keys = jax.random.normal(k_keys, (H, Nb), dtype=jnp.float32) * 0.1
    bank_labels = jax.random.randint(k_labels, (Nb,), 0, C)
    bank_values = jax.nn.one_hot(bank_labels, C, dtype=jnp.float32)   # F.one_hot(...).float()
    adapter_weight = bank_keys.T                                      # nn.Parameter(bank_keys.t())
    head_weight = jax.random.normal(k_hw, (C, H), dtype=jnp.float32) * 0.1
    head_bias = jax.random.normal(k_hb, (C,), dtype=jnp.float32) * 0.1

    out = automm_memory_bank_forward(x, bank_keys, adapter_weight, bank_values,
                                     head_weight, head_bias, alpha=1.0, beta=1.0)
    jax.block_until_ready(out)

    ref_pure, ref_adapted, ref_ft = _reference_forward(
        x, bank_keys, adapter_weight, bank_values, head_weight, head_bias, 1.0, 1.0)

    assert jnp.allclose(out["pure_logits"], ref_pure, atol=1e-4, rtol=1e-4)
    assert jnp.allclose(out["adapted_logits"], ref_adapted, atol=1e-4, rtol=1e-4)
    assert jnp.allclose(out["adapted_logits_with_finetuning"], ref_ft, atol=1e-4, rtol=1e-4)

    print("KERNEL_OK")
</pallas_src>

<mosaic_0001>
module attributes {stable_mosaic.version = 11 : i64} {
  func.func @_memory_bank_kernel(%arg0: i32, %arg1: memref<8x32xf32, #tpu.memory_space<vmem>>, %arg2: memref<32x384xf32, #tpu.memory_space<vmem>>, %arg3: memref<1x128xf32, #tpu.memory_space<vmem>>, %arg4: memref<128x128xf32, #tpu.memory_space<vmem>>, %arg5: memref<8x128xf32, #tpu.memory_space<vmem>>, %arg6: memref<8x128xf32, #tpu.memory_space<vmem>>, %arg7: memref<8x128xf32, #tpu.memory_space<vmem>>) attributes {dimension_semantics = [#tpu.dimension_semantics<parallel>], iteration_bounds = array<i64: 1>, scalar_prefetch = 0 : i64, scratch_operands = 0 : i64, tpu.core_type = #tpu.core_type<tc>, window_params = [{transform_indices = @transform_0, window_bounds = array<i64: 8, 32>}, {pipeline_mode = #tpu.pipeline_mode<synchronous>, transform_indices = @transform_1, window_bounds = array<i64: 32, 384>}, {pipeline_mode = #tpu.pipeline_mode<synchronous>, transform_indices = @transform_2, window_bounds = array<i64: 1, 128>}, {pipeline_mode = #tpu.pipeline_mode<synchronous>, transform_indices = @transform_3, window_bounds = array<i64: 128, 128>}, {transform_indices = @transform_4, window_bounds = array<i64: 8, 128>}, {transform_indices = @transform_5, window_bounds = array<i64: 8, 128>}, {transform_indices = @transform_6, window_bounds = array<i64: 8, 128>}]} {
    %c0 = arith.constant 0 : index
    %c0_0 = arith.constant 0 : index
    %0 = vector.load %arg1[%c0, %c0_0] : memref<8x32xf32, #tpu.memory_space<vmem>>, vector<8x32xf32>
    %c0_1 = arith.constant 0 : index
    %c0_2 = arith.constant 0 : index
    %1 = vector.load %arg2[%c0_1, %c0_2] : memref<32x384xf32, #tpu.memory_space<vmem>>, vector<32x384xf32>
    %cst = arith.constant dense<0.000000e+00> : vector<8x384xf32>
    %2 = tpu.matmul %0, %1, %cst {dimension_numbers = #tpu.dot_dimension_numbers<[1], [0], [0], [1], [0, 0, 1, 1], [], []>} : vector<8x32xf32>, vector<32x384xf32>, vector<8x384xf32> -> vector<8x384xf32>
    %3 = vector.extract_strided_slice %2 {offsets = [0, 0], sizes = [8, 128], strides = [1, 1]} : vector<8x384xf32> to vector<8x128xf32>
    %c0_3 = arith.constant 0 : index
    %c0_4 = arith.constant 0 : index
    %4 = vector.load %arg3[%c0_3, %c0_4] : memref<1x128xf32, #tpu.memory_space<vmem>>, vector<1x128xf32>
    %5 = vector.broadcast %4 : vector<1x128xf32> to vector<8x128xf32>
    %6 = arith.addf %3, %5 : vector<8x128xf32>
    %7 = vector.extract_strided_slice %2 {offsets = [0, 128], sizes = [8, 128], strides = [1, 1]} : vector<8x384xf32> to vector<8x128xf32>
    %8 = vector.extract_strided_slice %2 {offsets = [0, 256], sizes = [8, 128], strides = [1, 1]} : vector<8x384xf32> to vector<8x128xf32>
    %9 = tpu.concatenate %7, %8 in 0 : vector<8x128xf32>, vector<8x128xf32> -> vector<16x128xf32>
    %cst_5 = arith.constant 1.000000e+00 : f32
    %10 = vector.broadcast %cst_5 : f32 to vector<16x128xf32>
    %11 = arith.subf %9, %10 : vector<16x128xf32>
    %cst_6 = arith.constant 1.000000e+00 : f32
    %12 = vector.broadcast %cst_6 : f32 to vector<16x128xf32>
    %13 = arith.mulf %12, %11 : vector<16x128xf32>
    %14 = math.exp %13 : vector<16x128xf32>
    %c0_7 = arith.constant 0 : index
    %c0_8 = arith.constant 0 : index
    %15 = vector.load %arg4[%c0_7, %c0_8] : memref<128x128xf32, #tpu.memory_space<vmem>>, vector<128x128xf32>
    %cst_9 = arith.constant dense<0.000000e+00> : vector<16x128xf32>
    %16 = tpu.matmul %14, %15, %cst_9 {dimension_numbers = #tpu.dot_dimension_numbers<[1], [0], [0], [1], [0, 0, 1, 1], [], []>} : vector<16x128xf32>, vector<128x128xf32>, vector<16x128xf32> -> vector<16x128xf32>
    %c0_10 = arith.constant 0 : index
    %c0_11 = arith.constant 0 : index
    %17 = vector.load %arg5[%c0_10, %c0_11] : memref<8x128xf32, #tpu.memory_space<vmem>>, vector<8x128xf32>
    tpu.vector_store %arg5[%c0_10, %c0_11], %6 {strides = array<i32>} : memref<8x128xf32, #tpu.memory_space<vmem>>, vector<8x128xf32>,
    %18 = vector.extract_strided_slice %16 {offsets = [0, 0], sizes = [8, 128], strides = [1, 1]} : vector<16x128xf32> to vector<8x128xf32>
    %cst_12 = arith.constant 1.000000e+00 : f32
    %19 = vector.broadcast %cst_12 : f32 to vector<8x128xf32>
    %20 = arith.mulf %19, %18 : vector<8x128xf32>
    %21 = arith.addf %6, %20 : vector<8x128xf32>
    %c0_13 = arith.constant 0 : index
    %c0_14 = arith.constant 0 : index
    %22 = vector.load %arg6[%c0_13, %c0_14] : memref<8x128xf32, #tpu.memory_space<vmem>>, vector<8x128xf32>
    tpu.vector_store %arg6[%c0_13, %c0_14], %21 {strides = array<i32>} : memref<8x128xf32, #tpu.memory_space<vmem>>, vector<8x128xf32>,
    %23 = vector.extract_strided_slice %16 {offsets = [8, 0], sizes = [8, 128], strides = [1, 1]} : vector<16x128xf32> to vector<8x128xf32>
    %cst_15 = arith.constant 1.000000e+00 : f32
    %24 = vector.broadcast %cst_15 : f32 to vector<8x128xf32>
    %25 = arith.mulf %24, %23 : vector<8x128xf32>
    %26 = arith.addf %6, %25 : vector<8x128xf32>
    %c0_16 = arith.constant 0 : index
    %c0_17 = arith.constant 0 : index
    %27 = vector.load %arg7[%c0_16, %c0_17] : memref<8x128xf32, #tpu.memory_space<vmem>>, vector<8x128xf32>
    tpu.vector_store %arg7[%c0_16, %c0_17], %26 {strides = array<i32>} : memref<8x128xf32, #tpu.memory_space<vmem>>, vector<8x128xf32>,
    return
  }
  func.func @transform_0(%arg0: i32) -> (i32, i32) {
    %c0_i32 = arith.constant 0 : i32
    %c0_i32_0 = arith.constant 0 : i32
    return %arg0, %c0_i32 : i32, i32
  }
  func.func @transform_1(%arg0: i32) -> (i32, i32) {
    %c0_i32 = arith.constant 0 : i32
    %c0_i32_0 = arith.constant 0 : i32
    %c0_i32_1 = arith.constant 0 : i32
    return %c0_i32, %c0_i32_0 : i32, i32
  }
  func.func @transform_2(%arg0: i32) -> (i32, i32) {
    %c0_i32 = arith.constant 0 : i32
    %c0_i32_0 = arith.constant 0 : i32
    %c0_i32_1 = arith.constant 0 : i32
    return %c0_i32, %c0_i32_0 : i32, i32
  }
  func.func @transform_3(%arg0: i32) -> (i32, i32) {
    %c0_i32 = arith.constant 0 : i32
    %c0_i32_0 = arith.constant 0 : i32
    %c0_i32_1 = arith.constant 0 : i32
    return %c0_i32, %c0_i32_0 : i32, i32
  }
  func.func @transform_4(%arg0: i32) -> (i32, i32) {
    %c0_i32 = arith.constant 0 : i32
    %c0_i32_0 = arith.constant 0 : i32
    return %arg0, %c0_i32 : i32, i32
  }
  func.func @transform_5(%arg0: i32) -> (i32, i32) {
    %c0_i32 = arith.constant 0 : i32
    %c0_i32_0 = arith.constant 0 : i32
    return %arg0, %c0_i32 : i32, i32
  }
  func.func @transform_6(%arg0: i32) -> (i32, i32) {
    %c0_i32 = arith.constant 0 : i32
    %c0_i32_0 = arith.constant 0 : i32
    return %arg0, %c0_i32 : i32, i32
  }
}

</mosaic_0001>

<llo_original>
// kernel: tpu_custom_call.1
$region0: #{tpu_custom_call.1}
  #allocation0 [shape = 'u32[]', space=smem, size = 0x4, offset = 0x4, fixed_abs, tag = 'smem constant byte address 0x4 - core index']
  #allocation1 [shape = 'u32[144,128]{1,0:T(1,128)}', space=vmem, size = 0x12000, scoped, tag = 'internal scratch']
  %s0 = inlined_call_operand.hbm [shape: f32[8,32], index: 0, kind: input, shape index: {}]
  %s1 = inlined_call_operand.hbm [shape: f32[32,384], index: 1, kind: input, shape index: {}]
  %s2 = inlined_call_operand.vmem [shape: f32[1,128], index: 2, kind: input, shape index: {}]
  %s3 = inlined_call_operand.hbm [shape: f32[128,128], index: 3, kind: input, shape index: {}]
  %s4 = inlined_call_operand.hbm [shape: f32[8,128], index: 4, kind: output, shape index: {0}]
  %s5 = inlined_call_operand.hbm [shape: f32[8,128], index: 5, kind: output, shape index: {1}]
  %s6 = inlined_call_operand.hbm [shape: f32[8,128], index: 6, kind: output, shape index: {2}]
  %7 = xla_tuple %s4, %s5, %s6
  %s8 = sld [smem:[#allocation0]]
  $region54: #{tpu_custom_call.1} parent=0
    _
  %s10 = ssub.s32 1, %s8
  %s11 = scalar_select 0, %s10, %s8
  $region1: #{tpu_custom_call.1} parent=0
    #allocation2 [shape = 'u8[4096]{0}', space=vmem, size = 0x1000, scoped, tag = 'input window, operand 0, single buffered']
    #allocation3 [shape = 's32[1]{0}', space=sflag, size = 0x4, scoped, tag = 'scoped memory for tpu_custom_call.1']
    #allocation4 [shape = 's32[1]{0}', space=sflag, size = 0x4, scoped, tag = 'scoped memory for tpu_custom_call.1']
    #allocation5 [shape = 'u8[49152]{0}', space=vmem, size = 0xc000, scoped, tag = 'input window, operand 1, single buffered']
    #allocation6 [shape = 's32[1]{0}', space=sflag, size = 0x4, scoped, tag = 'scoped memory for tpu_custom_call.1']
    #allocation7 [shape = 'u8[65536]{0}', space=vmem, size = 0x10000, scoped, tag = 'input window, operand 3, single buffered']
    #allocation8 [shape = 'u8[4096]{0}', space=vmem, size = 0x1000, scoped, tag = 'output window, operand 0, single buffered']
    #allocation9 [shape = 'u8[4096]{0}', space=vmem, size = 0x1000, scoped, tag = 'output window, operand 1, single buffered']
    #allocation10 [shape = 's32[1]{0}', space=sflag, size = 0x4, scoped, tag = 'scoped memory for tpu_custom_call.1']
    #allocation11 [shape = 'u8[4096]{0}', space=vmem, size = 0x1000, scoped, tag = 'output window, operand 2, single buffered']
    %12 = vsyncpa [#allocation3], 0
    %13 = vsyncpa [#allocation6], 0
    %14 = vsyncpa [#allocation4], 0
    %15 = vsyncpa [#allocation10], 0
    // Predicated region
    $region2: #{tpu_custom_call.1} parent=1 // pred_check
      _
    $region3: #{tpu_custom_call.1} parent=1 // pred_check_branch
      %17 = sbr.rel (0) target = $region5
    $region4: #{tpu_custom_call.1} parent=1 // pred_region
      %s19 = ssub.s32 128, 128
      %20 = vsyncadd [#allocation3], %s19
      %s22 = sshll.u32 [#allocation2], 4
      %s23 = int_to_ptr.vmem [resolvable:$true] %s22
      %25 = dma.hbm_to_vmem [thread:$0]  %s0, 128, %s23, [#allocation3]
    $region5: #{tpu_custom_call.1} parent=1 // pred_fallthru
      _
    // Predicated region
    $region6: #{tpu_custom_call.1} parent=1 // pred_check
      _
    $region7: #{tpu_custom_call.1} parent=1 // pred_check_branch
      %27 = sbr.rel (0) target = $region9
    $region8: #{tpu_custom_call.1} parent=1 // pred_region
      %s29 = ssub.s32 1536, 1536
      %30 = vsyncadd [#allocation6], %s29
      %s31 = sshll.u32 [#allocation5], 4
      %s32 = int_to_ptr.vmem [resolvable:$true] %s31
      %37 = dma.hbm_to_vmem [thread:$0]  %s1, 1536, %s32, [#allocation6], 384, 384, 24
    $region9: #{tpu_custom_call.1} parent=1 // pred_fallthru
      _
    // Predicated region
    $region10: #{tpu_custom_call.1} parent=1 // pred_check
      _
    $region11: #{tpu_custom_call.1} parent=1 // pred_check_branch
      %39 = sbr.rel (0) target = $region13
    $region12: #{tpu_custom_call.1} parent=1 // pred_region
      _
    $region13: #{tpu_custom_call.1} parent=1 // pred_fallthru
      _
    // Predicated region
    $region14: #{tpu_custom_call.1} parent=1 // pred_check
      _
    $region15: #{tpu_custom_call.1} parent=1 // pred_check_branch
      %41 = sbr.rel (0) target = $region17
    $region16: #{tpu_custom_call.1} parent=1 // pred_region
      %s43 = ssub.s32 2048, 2048
      %44 = vsyncadd [#allocation6], %s43
      %s45 = sshll.u32 [#allocation7], 4
      %s46 = int_to_ptr.vmem [resolvable:$true] %s45
      %51 = dma.hbm_to_vmem [thread:$0]  %s3, 2048, %s46, [#allocation6], 128, 128, 8
    $region17: #{tpu_custom_call.1} parent=1 // pred_fallthru
      _
    // Predicated region
    $region18: #{tpu_custom_call.1} parent=1 // pred_check
      _
    $region19: #{tpu_custom_call.1} parent=1 // pred_check_branch
      %53 = sbr.rel (0) target = $region21
    $region20: #{tpu_custom_call.1} parent=1 // pred_region
      %54 = dma.done [#allocation3], 128
    $region21: #{tpu_custom_call.1} parent=1 // pred_fallthru
      _
    // Predicated region
    $region22: #{tpu_custom_call.1} parent=1 // pred_check
      _
    $region23: #{tpu_custom_call.1} parent=1 // pred_check_branch
      %56 = sbr.rel (0) target = $region25
    $region24: #{tpu_custom_call.1} parent=1 // pred_region
      %57 = dma.done [#allocation6], 1536
    $region25: #{tpu_custom_call.1} parent=1 // pred_fallthru
      _
    // Predicated region
    $region26: #{tpu_custom_call.1} parent=1 // pred_check
      _
    $region27: #{tpu_custom_call.1} parent=1 // pred_check_branch
      %59 = sbr.rel (0) target = $region29
    $region28: #{tpu_custom_call.1} parent=1 // pred_region
      %60 = dma.done [#allocation6], 2048
    $region29: #{tpu_custom_call.1} parent=1 // pred_fallthru
      _
    %v61 = vld [vmem:[#allocation2] sm:$0xff]
    %v62 = vld [vmem:[#allocation5] sm:$0xff]
    %v63 = vld [vmem:[#allocation5 + $0x8] sm:$0xff]
    %v64 = vld [vmem:[#allocation5 + $0x10] sm:$0xff]
    %v65 = vld [vmem:[#allocation5 + $0x18] sm:$0xff]
    %v66 = vld [vmem:[#allocation5 + $0x20] sm:$0xff]
    %v67 = vld [vmem:[#allocation5 + $0x28] sm:$0xff]
    %v68 = vld [vmem:[#allocation5 + $0x30] sm:$0xff]
    %v69 = vld [vmem:[#allocation5 + $0x38] sm:$0xff]
    %v70 = vld [vmem:[#allocation5 + $0x40] sm:$0xff]
    %v71 = vld [vmem:[#allocation5 + $0x48] sm:$0xff]
    %v72 = vld [vmem:[#allocation5 + $0x50] sm:$0xff]
    %v73 = vld [vmem:[#allocation5 + $0x58] sm:$0xff]
    %vm74 = vcmask 261120
    %v76 = vsel %vm74, %v61, 0
    %78 = vmatprep.subr.mxu0 %v63
    %79 = vmatpush1.msra.mxu0 %v62
    %80 = vmatprep.subr.mxu0 %v66
    %81 = vmatpush1.msra.mxu0 %v65
    %82 = vmatprep.subr.mxu0 %v69
    %83 = vmatpush1.msra.mxu0 %v68
    %84 = vmatprep.subr.mxu0 %v72
    %85 = vmatpush1.msra.mxu0 %v71
    %86 = vmatprep.subr.mxu0 0.0
    %87 = vmatpush1.msra.mxu0 0.0
    %88 = vmatprep.subr.mxu0 0.0
    %89 = vmatpush1.msra.mxu0 0.0
    %90 = vmatprep.subr.mxu0 0.0
    %91 = vmatpush1.msra.mxu0 0.0
    %92 = vmatprep.subr.mxu0 0.0
    %93 = vmatpush1.msra.mxu0 0.0
    %94 = vmatprep.subr.mxu0 0.0
    %95 = vmatpush1.msra.mxu0 0.0
    %96 = vmatprep.subr.mxu0 0.0
    %97 = vmatpush1.msra.mxu0 0.0
    %98 = vmatprep.subr.mxu0 0.0
    %99 = vmatpush1.msra.mxu0 0.0
    %100 = vmatprep.subr.mxu0 0.0
    %101 = vmatpush1.msra.mxu0 0.0
    %102 = vmatprep.subr.mxu0 0.0
    %103 = vmatpush1.msra.mxu0 0.0
    %104 = vmatprep.subr.mxu0 0.0
    %105 = vmatpush1.msra.mxu0 0.0
    %106 = vmatprep.subr.mxu0 0.0
    %107 = vmatpush1.msra.mxu0 0.0
    %108 = vmatprep.subr.mxu0 0.0
    %109 = vmatpush1.msra.mxu0 0.0
    %110 = vmatprep.subr.mxu0 0.0
    %111 = vmatpush1.msra.mxu0 0.0
    %112 = vmatprep.subr.mxu0 0.0
    %113 = vmatpush1.msra.mxu0 0.0
    %114 = vmatprep.subr.mxu0 0.0
    %115 = vmatpush1.msra.mxu0 0.0
    %116 = vmatprep.subr.mxu0 0.0
    %117 = vmatpush1.msra.mxu0 0.0
    %118 = vmatprep.subr.mxu0 0.0
    %119 = vmatpush1.msra.mxu0 0.0
    %120 = vmatprep.subr.mxu0 0.0
    %121 = vmatpush1.msra.mxu0 0.0
    %122 = vmatprep.subr.mxu0 0.0
    %123 = vmatpush1.msra.mxu0 0.0
    %124 = vmatprep.subr.mxu0 0.0
    %125 = vmatpush1.msra.mxu0 0.0
    %126 = vmatprep.subr.mxu0 0.0
    %127 = vmatpush1.msra.mxu0 0.0
    %128 = vmatprep.subr.mxu0 0.0
    %129 = vmatpush1.msra.mxu0 0.0
    %130 = vmatprep.subr.mxu0 0.0
    %131 = vmatpush1.msra.mxu0 0.0
    %132 = vmatprep.subr.mxu0 0.0
    %133 = vmatpush1.msra.mxu0 0.0
    %134 = vmatprep.subr.mxu0 0.0
    %135 = vmatpush1.msra.mxu0 0.0
    %136 = vmatprep.subr.mxu0 0.0
    %137 = vmatpush1.msra.mxu0 0.0
    %138 = vmatprep.subr.mxu0 0.0
    %139 = vmatpush1.msra.mxu0 0.0
    %140 = vmatprep.subr.mxu0 0.0
    %141 = vmatpush1.msra.mxu0 0.0
    %142 = vmatprep.mubr.f32.mxu0 0.0
    %143 = vmatmul.mubr.f32.gmra.mrb[0].mxu0 %v76
    %v144 = vpop.f32.mrb[0].mxu0
    %v145 = vadd.f32 0.0, %v144
    %v146 = vpop.f32.mrb[0].mxu0
    %v147 = vadd.f32 0.0, %v146
    %148 = vdwg.mxu0
    %149 = vmatprep.subr.mxu0 0.0
    %150 = vmatpush1.msra.mxu0 %v64
    %151 = vmatprep.subr.mxu0 0.0
    %152 = vmatpush1.msra.mxu0 %v67
    %153 = vmatprep.subr.mxu0 0.0
    %154 = vmatpush1.msra.mxu0 %v70
    %155 = vmatprep.subr.mxu0 0.0
    %156 = vmatpush1.msra.mxu0 %v73
    %157 = vmatprep.subr.mxu0 0.0
    %158 = vmatpush1.msra.mxu0 0.0
    %159 = vmatprep.subr.mxu0 0.0
    %160 = vmatpush1.msra.mxu0 0.0
    %161 = vmatprep.subr.mxu0 0.0
    %162 = vmatpush1.msra.mxu0 0.0
    %163 = vmatprep.subr.mxu0 0.0
    %164 = vmatpush1.msra.mxu0 0.0
    %165 = vmatprep.subr.mxu0 0.0
    %166 = vmatpush1.msra.mxu0 0.0
    %167 = vmatprep.subr.mxu0 0.0
    %168 = vmatpush1.msra.mxu0 0.0
    %169 = vmatprep.subr.mxu0 0.0
    %170 = vmatpush1.msra.mxu0 0.0
    %171 = vmatprep.subr.mxu0 0.0
    %172 = vmatpush1.msra.mxu0 0.0
    %173 = vmatprep.subr.mxu0 0.0
    %174 = vmatpush1.msra.mxu0 0.0
    %175 = vmatprep.subr.mxu0 0.0
    %176 = vmatpush1.msra.mxu0 0.0
    %177 = vmatprep.subr.mxu0 0.0
    %178 = vmatpush1.msra.mxu0 0.0
    %179 = vmatprep.subr.mxu0 0.0
    %180 = vmatpush1.msra.mxu0 0.0
    %181 = vmatprep.subr.mxu0 0.0
    %182 = vmatpush1.msra.mxu0 0.0
    %183 = vmatprep.subr.mxu0 0.0
    %184 = vmatpush1.msra.mxu0 0.0
    %185 = vmatprep.subr.mxu0 0.0
    %186 = vmatpush1.msra.mxu0 0.0
    %187 = vmatprep.subr.mxu0 0.0
    %188 = vmatpush1.msra.mxu0 0.0
    %189 = vmatprep.subr.mxu0 0.0
    %190 = vmatpush1.msra.mxu0 0.0
    %191 = vmatprep.subr.mxu0 0.0
    %192 = vmatpush1.msra.mxu0 0.0
    %193 = vmatprep.subr.mxu0 0.0
    %194 = vmatpush1.msra.mxu0 0.0
    %195 = vmatprep.subr.mxu0 0.0
    %196 = vmatpush1.msra.mxu0 0.0
    %197 = vmatprep.subr.mxu0 0.0
    %198 = vmatpush1.msra.mxu0 0.0
    %199 = vmatprep.subr.mxu0 0.0
    %200 = vmatpush1.msra.mxu0 0.0
    %201 = vmatprep.subr.mxu0 0.0
    %202 = vmatpush1.msra.mxu0 0.0
    %203 = vmatprep.subr.mxu0 0.0
    %204 = vmatpush1.msra.mxu0 0.0
    %205 = vmatprep.subr.mxu0 0.0
    %206 = vmatpush1.msra.mxu0 0.0
    %207 = vmatprep.subr.mxu0 0.0
    %208 = vmatpush1.msra.mxu0 0.0
    %209 = vmatprep.subr.mxu0 0.0
    %210 = vmatpush1.msra.mxu0 0.0
    %211 = vmatprep.subr.mxu0 0.0
    %212 = vmatpush1.msra.mxu0 0.0
    %213 = vmatprep.mubr.f32.mxu0 0.0
    %214 = vmatmul.mubr.f32.gmra.mrb[0].mxu0 %v76
    %v215 = vpop.f32.mrb[0].mxu0
    %v216 = vadd.f32 0.0, %v215
    %v217 = vpop.f32.mrb[0].mxu0
    %218 = vdwg.mxu0
    %v219 = vld [vmem:[%s2] sm:$0x1]
    %v221 = vlaneseq
    %v222 = vshrl.u32 %v221, 7
    %v223 = vsub.s32 0, %v222
    %v224 = vrot.slane %v219, %v223
    %v226 = vadd.f32 %v145, %v224
    %v227 = vsub.f32 %v147, 1.0
    %v228 = vsub.f32 %v216, 1.0
    %v229 = vmul.f32 %v227, 1.442695
    %v230 = vpow.pop %v229
    %v231 = vmul.f32 %v228, 1.442695
    %v232 = vpow.pop %v231
    %v233 = vld [vmem:[#allocation7] sm:$0xff]
    %v234 = vld [vmem:[#allocation7 + $0x8] sm:$0xff]
    %v235 = vld [vmem:[#allocation7 + $0x10] sm:$0xff]
    %v236 = vld [vmem:[#allocation7 + $0x18] sm:$0xff]
    %v237 = vld [vmem:[#allocation7 + $0x20] sm:$0xff]
    %v238 = vld [vmem:[#allocation7 + $0x28] sm:$0xff]
    %v239 = vld [vmem:[#allocation7 + $0x30] sm:$0xff]
    %v240 = vld [vmem:[#allocation7 + $0x38] sm:$0xff]
    %v241 = vld [vmem:[#allocation7 + $0x40] sm:$0xff]
    %v242 = vld [vmem:[#allocation7 + $0x48] sm:$0xff]
    %v243 = vld [vmem:[#allocation7 + $0x50] sm:$0xff]
    %v244 = vld [vmem:[#allocation7 + $0x58] sm:$0xff]
    %v245 = vld [vmem:[#allocation7 + $0x60] sm:$0xff]
    %v246 = vld [vmem:[#allocation7 + $0x68] sm:$0xff]
    %v247 = vld [vmem:[#allocation7 + $0x70] sm:$0xff]
    %v248 = vld [vmem:[#allocation7 + $0x78] sm:$0xff]
    %249 = vmatprep.subr.mxu0 0.0
    %250 = vmatpush1.msra.mxu0 %v233
    %251 = vmatprep.subr.mxu0 0.0
    %252 = vmatpush1.msra.mxu0 %v234
    %253 = vmatprep.subr.mxu0 0.0
    %254 = vmatpush1.msra.mxu0 %v235
    %255 = vmatprep.subr.mxu0 0.0
    %256 = vmatpush1.msra.mxu0 %v236
    %257 = vmatprep.subr.mxu0 0.0
    %258 = vmatpush1.msra.mxu0 %v237
    %259 = vmatprep.subr.mxu0 0.0
    %260 = vmatpush1.msra.mxu0 %v238
    %261 = vmatprep.subr.mxu0 0.0
    %262 = vmatpush1.msra.mxu0 %v239
    %263 = vmatprep.subr.mxu0 0.0
    %264 = vmatpush1.msra.mxu0 %v240
    %265 = vmatprep.subr.mxu0 0.0
    %266 = vmatpush1.msra.mxu0 %v241
    %267 = vmatprep.subr.mxu0 0.0
    %268 = vmatpush1.msra.mxu0 %v242
    %269 = vmatprep.subr.mxu0 0.0
    %270 = vmatpush1.msra.mxu0 %v243
    %271 = vmatprep.subr.mxu0 0.0
    %272 = vmatpush1.msra.mxu0 %v244
    %273 = vmatprep.subr.mxu0 0.0
    %274 = vmatpush1.msra.mxu0 %v245
    %275 = vmatprep.subr.mxu0 0.0
    %276 = vmatpush1.msra.mxu0 %v246
    %277 = vmatprep.subr.mxu0 0.0
    %278 = vmatpush1.msra.mxu0 %v247
    %279 = vmatprep.subr.mxu0 0.0
    %280 = vmatpush1.msra.mxu0 %v248
    %281 = vmatprep.subr.mxu0 0.0
    %282 = vmatpush1.msra.mxu0 0.0
    %283 = vmatprep.subr.mxu0 0.0
    %284 = vmatpush1.msra.mxu0 0.0
    %285 = vmatprep.subr.mxu0 0.0
    %286 = vmatpush1.msra.mxu0 0.0
    %287 = vmatprep.subr.mxu0 0.0
    %288 = vmatpush1.msra.mxu0 0.0
    %289 = vmatprep.subr.mxu0 0.0
    %290 = vmatpush1.msra.mxu0 0.0
    %291 = vmatprep.subr.mxu0 0.0
    %292 = vmatpush1.msra.mxu0 0.0
    %293 = vmatprep.subr.mxu0 0.0
    %294 = vmatpush1.msra.mxu0 0.0
    %295 = vmatprep.subr.mxu0 0.0
    %296 = vmatpush1.msra.mxu0 0.0
    %297 = vmatprep.subr.mxu0 0.0
    %298 = vmatpush1.msra.mxu0 0.0
    %299 = vmatprep.subr.mxu0 0.0
    %300 = vmatpush1.msra.mxu0 0.0
    %301 = vmatprep.subr.mxu0 0.0
    %302 = vmatpush1.msra.mxu0 0.0
    %303 = vmatprep.subr.mxu0 0.0
    %304 = vmatpush1.msra.mxu0 0.0
    %305 = vmatprep.subr.mxu0 0.0
    %306 = vmatpush1.msra.mxu0 0.0
    %307 = vmatprep.subr.mxu0 0.0
    %308 = vmatpush1.msra.mxu0 0.0
    %309 = vmatprep.subr.mxu0 0.0
    %310 = vmatpush1.msra.mxu0 0.0
    %311 = vmatprep.subr.mxu0 0.0
    %312 = vmatpush1.msra.mxu0 0.0
    %313 = vmatprep.mubr.f32.mxu0 0.0
    %314 = vmatmul.mubr.f32.gmra.mrb[0].mxu0 %v230
    %v315 = vpop.f32.mrb[0].mxu0
    %v316 = vadd.f32 0.0, %v315
    %v317 = vpop.f32.mrb[0].mxu0
    %318 = vmatprep.mubr.f32.mxu0 0.0
    %319 = vmatmul.mubr.f32.gmra.mrb[0].mxu0 %v232
    %v320 = vpop.f32.mrb[0].mxu0
    %v321 = vadd.f32 0.0, %v320
    %v322 = vpop.f32.mrb[0].mxu0
    %323 = vdwg.mxu0
    %324 = vst [vmem:[#allocation8] sm:$0xff] %v226
    %v325 = vadd.f32 %v226, %v316
    %326 = vst [vmem:[#allocation9] sm:$0xff] %v325
    %v327 = vadd.f32 %v226, %v321
    %328 = vst [vmem:[#allocation11] sm:$0xff] %v327
    // Predicated region
    $region30: #{tpu_custom_call.1} parent=1 // pred_check
      _
    $region31: #{tpu_custom_call.1} parent=1 // pred_check_branch
      %330 = sbr.rel (0) target = $region33
    $region32: #{tpu_custom_call.1} parent=1 // pred_region
      %s332 = ssub.s32 128, 128
      %333 = vsyncadd [#allocation4], %s332
      %s335 = sshll.u32 [#allocation8], 4
      %s336 = int_to_ptr.vmem [resolvable:$true] %s335
      %338 = dma.vmem_to_hbm [thread:$0]  %s336, 128, %s4, [#allocation4]
    $region33: #{tpu_custom_call.1} parent=1 // pred_fallthru
      _
    // Predicated region
    $region34: #{tpu_custom_call.1} parent=1 // pred_check
      _
    $region35: #{tpu_custom_call.1} parent=1 // pred_check_branch
      %340 = sbr.rel (0) target = $region37
    $region36: #{tpu_custom_call.1} parent=1 // pred_region
      %s342 = ssub.s32 128, 128
      %343 = vsyncadd [#allocation10], %s342
      %s345 = sshll.u32 [#allocation9], 4
      %s346 = int_to_ptr.vmem [resolvable:$true] %s345
      %348 = dma.vmem_to_hbm [thread:$0]  %s346, 128, %s5, [#allocation10]
    $region37: #{tpu_custom_call.1} parent=1 // pred_fallthru
      _
    // Predicated region
    $region38: #{tpu_custom_call.1} parent=1 // pred_check
      _
    $region39: #{tpu_custom_call.1} parent=1 // pred_check_branch
      %350 = sbr.rel (0) target = $region41
    $region40: #{tpu_custom_call.1} parent=1 // pred_region
      %s352 = ssub.s32 128, 128
      %353 = vsyncadd [#allocation10], %s352
      %s355 = sshll.u32 [#allocation11], 4
      %s356 = int_to_ptr.vmem [resolvable:$true] %s355
      %358 = dma.vmem_to_hbm [thread:$0]  %s356, 128, %s6, [#allocation10]
    $region41: #{tpu_custom_call.1} parent=1 // pred_fallthru
      _
    // Predicated region
    $region42: #{tpu_custom_call.1} parent=1 // pred_check
      _
    $region43: #{tpu_custom_call.1} parent=1 // pred_check_branch
      %360 = sbr.rel (0) target = $region45
    $region44: #{tpu_custom_call.1} parent=1 // pred_region
      %361 = dma.done [#allocation4], 128
    $region45: #{tpu_custom_call.1} parent=1 // pred_fallthru
      _
    // Predicated region
    $region46: #{tpu_custom_call.1} parent=1 // pred_check
      _
    $region47: #{tpu_custom_call.1} parent=1 // pred_check_branch
      %363 = sbr.rel (0) target = $region49
    $region48: #{tpu_custom_call.1} parent=1 // pred_region
      %364 = dma.done [#allocation10], 128
    $region49: #{tpu_custom_call.1} parent=1 // pred_fallthru
      _
    // Predicated region
    $region50: #{tpu_custom_call.1} parent=1 // pred_check
      _
    $region51: #{tpu_custom_call.1} parent=1 // pred_check_branch
      %366 = sbr.rel (0) target = $region53
    $region52: #{tpu_custom_call.1} parent=1 // pred_region
      %367 = dma.done [#allocation10], 128
    $region53: #{tpu_custom_call.1} parent=1 // pred_fallthru
      _
    %368 = vsyncpa [#allocation3], 1
    %369 = vsyncpa [#allocation6], 1
    %370 = vsyncpa [#allocation4], 1
    %371 = vsyncpa [#allocation10], 1

</llo_original>
